<compile_context>
chip_gen: v5e
topology: v5e:2x2
jax: 0.10.0
libtpu: 0.0.40
codegen_flags: <defaults>
</compile_context>

<pallas_src>
import functools
import math

import jax
import jax.numpy as jnp
from jax.experimental import pallas as pl
from jax.experimental.pallas import tpu as pltpu


# ----------------------------------------------------------------------------
# Config helpers (mirror the PyTorch module)
# ----------------------------------------------------------------------------
def make_divisible(v, divisor, min_value=None):
    if min_value is None:
        min_value = divisor
    new_v = max(min_value, int(v + divisor / 2) // divisor * divisor)
    if new_v < 0.9 * v:
        new_v += divisor
    return new_v


CFGS = [[64, 1], [128, 2], [128, 1], [256, 2], [256, 1], [512, 2],
        [512, 1], [512, 1], [512, 1], [512, 1], [512, 1], [1024, 2], [1024, 2]]

ACT_DTYPE = jnp.bfloat16          # activations / weights in HBM
_VMEM_LIMIT = 32 * 1024 * 1024    # covers the larger tiles on all generations


# ----------------------------------------------------------------------------
# Pallas kernels
# ----------------------------------------------------------------------------
def _matmul_bn_act_kernel(x_ref, w_ref, scale_ref, bias_ref, o_ref, *, relu):
    acc = jnp.dot(x_ref[...], w_ref[...], preferred_element_type=jnp.float32)
    y = acc * scale_ref[...] + bias_ref[...]
    if relu:
        y = jnp.maximum(y, 0.0)
    o_ref[...] = y.astype(o_ref.dtype)


def matmul_bn_act(x, w, scale, bias, *, relu, out_dtype=None, tm_max=512):
    """act((x @ w) * scale + bias).  x: [M, K], w: [K, N], scale/bias: [N]."""
    M, K = x.shape
    N = w.shape[1]
    out_dtype = x.dtype if out_dtype is None else out_dtype
    tm = M if M <= tm_max else tm_max          # full-dim block when small
    grid = (pl.cdiv(M, tm),)
    return pl.pallas_call(
        functools.partial(_matmul_bn_act_kernel, relu=relu),
        out_shape=jax.ShapeDtypeStruct((M, N), out_dtype),
        grid=grid,
        in_specs=[
            pl.BlockSpec((tm, K), lambda i: (i, 0)),
            pl.BlockSpec((K, N), lambda i: (0, 0)),
            pl.BlockSpec((1, N), lambda i: (0, 0)),
            pl.BlockSpec((1, N), lambda i: (0, 0)),
        ],
        out_specs=pl.BlockSpec((tm, N), lambda i: (i, 0)),
        compiler_params=pltpu.CompilerParams(
            dimension_semantics=("parallel",),
            vmem_limit_bytes=_VMEM_LIMIT),
    )(x, w, scale.reshape(1, N), bias.reshape(1, N))


def _dw_s1_kernel(x_ref, w_ref, scale_ref, bias_ref, o_ref, *, H, W):
    # x_ref: (1, H+2, W+2, C) zero-padded input plane, o_ref: (1, H, W, C)
    acc = None
    for ky in range(3):
        for kx in range(3):
            tap = x_ref[0, ky:ky + H, kx:kx + W, :].astype(jnp.float32)
            wv = w_ref[ky:ky + 1, kx:kx + 1, :].astype(jnp.float32)   # (1,1,C)
            term = tap * wv
            acc = term if acc is None else acc + term
    y = acc * scale_ref[...] + bias_ref[...]
    y = jnp.maximum(y, 0.0)
    o_ref[0] = y.astype(o_ref.dtype)


def dwconv3x3_bn_relu_s1(x, w3x3c, scale, bias):
    """Depthwise 3x3, stride 1, pad 1, BN + ReLU fused.  x: [N, H, W, C]."""
    N, H, W, C = x.shape
    xp = jnp.pad(x, ((0, 0), (1, 1), (1, 1), (0, 0)))
    return pl.pallas_call(
        functools.partial(_dw_s1_kernel, H=H, W=W),
        out_shape=jax.ShapeDtypeStruct((N, H, W, C), x.dtype),
        grid=(N,),
        in_specs=[
            pl.BlockSpec((1, H + 2, W + 2, C), lambda n: (n, 0, 0, 0)),
            pl.BlockSpec((3, 3, C), lambda n: (0, 0, 0)),
            pl.BlockSpec((1, C), lambda n: (0, 0)),
            pl.BlockSpec((1, C), lambda n: (0, 0)),
        ],
        out_specs=pl.BlockSpec((1, H, W, C), lambda n: (n, 0, 0, 0)),
        compiler_params=pltpu.CompilerParams(
            dimension_semantics=("parallel",),
            vmem_limit_bytes=_VMEM_LIMIT),
    )(xp, w3x3c, scale.reshape(1, C), bias.reshape(1, C))


def _dw_s2_kernel(ph_ref, w_ref, scale_ref, bias_ref, o_ref, *, Ho, Wo):
    # ph_ref: (1, 4, Ho+1, Wo+1, C) phase-split padded input, phase = 2*py+px
    acc = None
    for ky in range(3):
        for kx in range(3):
            dy, py = divmod(ky, 2)
            dx, px = divmod(kx, 2)
            p = 2 * py + px
            tap = ph_ref[0, p, dy:dy + Ho, dx:dx + Wo, :].astype(jnp.float32)
            wv = w_ref[ky:ky + 1, kx:kx + 1, :].astype(jnp.float32)
            term = tap * wv
            acc = term if acc is None else acc + term
    y = acc * scale_ref[...] + bias_ref[...]
    y = jnp.maximum(y, 0.0)
    o_ref[0] = y.astype(o_ref.dtype)


def dwconv3x3_bn_relu_s2(x, w3x3c, scale, bias):
    """Depthwise 3x3, stride 2, pad 1, BN + ReLU fused.  x: [N, H, W, C]."""
    N, H, W, C = x.shape
    Ho = (H - 1) // 2 + 1
    Wo = (W - 1) // 2 + 1
    Hp = 2 * (Ho + 1)
    Wp = 2 * (Wo + 1)
    xp = jnp.pad(x, ((0, 0), (1, Hp - H - 1), (1, Wp - W - 1), (0, 0)))
    # phase-split so the kernel only needs contiguous (non-strided) slices
    phases = xp.reshape(N, Ho + 1, 2, Wo + 1, 2, C)
    phases = phases.transpose(0, 2, 4, 1, 3, 5).reshape(N, 4, Ho + 1, Wo + 1, C)
    return pl.pallas_call(
        functools.partial(_dw_s2_kernel, Ho=Ho, Wo=Wo),
        out_shape=jax.ShapeDtypeStruct((N, Ho, Wo, C), x.dtype),
        grid=(N,),
        in_specs=[
            pl.BlockSpec((1, 4, Ho + 1, Wo + 1, C), lambda n: (n, 0, 0, 0, 0)),
            pl.BlockSpec((3, 3, C), lambda n: (0, 0, 0)),
            pl.BlockSpec((1, C), lambda n: (0, 0)),
            pl.BlockSpec((1, C), lambda n: (0, 0)),
        ],
        out_specs=pl.BlockSpec((1, Ho, Wo, C), lambda n: (n, 0, 0, 0)),
        compiler_params=pltpu.CompilerParams(
            dimension_semantics=("parallel",),
            vmem_limit_bytes=_VMEM_LIMIT),
    )(phases, w3x3c, scale.reshape(1, C), bias.reshape(1, C))


def _avgpool_kernel(x_ref, o_ref):
    o_ref[...] = jnp.mean(x_ref[...].astype(jnp.float32), axis=1,
                          keepdims=True).astype(o_ref.dtype)


def global_avgpool(x):
    """x: [N, HW, C] -> [N, C]  (AdaptiveAvgPool2d((1,1)) + flatten)."""
    N, HW, C = x.shape
    out = pl.pallas_call(
        _avgpool_kernel,
        out_shape=jax.ShapeDtypeStruct((N, 1, C), x.dtype),
        grid=(N,),
        in_specs=[pl.BlockSpec((1, HW, C), lambda n: (n, 0, 0))],
        out_specs=pl.BlockSpec((1, 1, C), lambda n: (n, 0, 0)),
        compiler_params=pltpu.CompilerParams(
            dimension_semantics=("parallel",)),
    )(x)
    return out.reshape(N, C)


# ----------------------------------------------------------------------------
# JAX glue: stem im2col, layer wrappers
# ----------------------------------------------------------------------------
def _extract_patches_3x3(x, stride):
    """x: [N, H, W, C] -> [N, Ho, Wo, 9, C] for a 3x3 conv with pad=1."""
    N, H, W, C = x.shape
    Ho = (H - 1) // stride + 1
    Wo = (W - 1) // stride + 1
    xp = jnp.pad(x, ((0, 0), (1, 1), (1, 1), (0, 0)))
    taps = []
    for ky in range(3):
        for kx in range(3):
            taps.append(xp[:, ky:ky + stride * (Ho - 1) + 1:stride,
                           kx:kx + stride * (Wo - 1) + 1:stride, :])
    return jnp.stack(taps, axis=3)


def conv3x3_bn_relu_stem(x, wm, scale, bias, stride):
    """Standard 3x3 conv (Cin=3 stem) via small im2col + fused matmul."""
    N, H, W, Cin = x.shape
    patches = _extract_patches_3x3(x, stride)
    _, Ho, Wo, _, _ = patches.shape
    xm = patches.reshape(N * Ho * Wo, 9 * Cin)
    Cout = wm.shape[1]
    y = matmul_bn_act(xm, wm, scale, bias, relu=True)
    return y.reshape(N, Ho, Wo, Cout)


def pwconv_bn_relu(x, wm, scale, bias):
    N, H, W, Cin = x.shape
    Cout = wm.shape[1]
    y = matmul_bn_act(x.reshape(N * H * W, Cin), wm, scale, bias, relu=True)
    return y.reshape(N, H, W, Cout)


# ----------------------------------------------------------------------------
# Parameters: raw (mirrors PyTorch _initialize_weights), then one-time prep
# ----------------------------------------------------------------------------
def _fold_bn(bn):
    scale = bn["gamma"] / jnp.sqrt(bn["var"] + bn["eps"])
    bias = bn["beta"] - bn["mean"] * scale
    return scale.astype(jnp.float32), bias.astype(jnp.float32)


def build_params(key, num_classes=1000, width_mult=1.0):
    keys = iter(jax.random.split(key, 64))

    def conv_w(shape):  # (Cout, Cin_per_group, kh, kw)
        cout, _, kh, kw = shape
        n = kh * kw * cout
        return jax.random.normal(next(keys), shape, jnp.float32) * math.sqrt(2.0 / n)

    def bn_p(c):
        return dict(gamma=jnp.ones((c,), jnp.float32),
                    beta=jnp.zeros((c,), jnp.float32),
                    mean=jnp.zeros((c,), jnp.float32),
                    var=jnp.ones((c,), jnp.float32),
                    eps=1e-5)

    divisor = 4 if width_mult == 0.1 else 8
    in_c = make_divisible(32 * width_mult, divisor)
    raw = {"stem": {"w": conv_w((in_c, 3, 3, 3)), "bn": bn_p(in_c)},
           "blocks": []}
    for c, s in CFGS:
        out_c = make_divisible(c * width_mult, divisor)
        raw["blocks"].append({
            "stride": s,
            "dw_w": conv_w((in_c, 1, 3, 3)), "dw_bn": bn_p(in_c),
            "pw_w": conv_w((out_c, in_c, 1, 1)), "pw_bn": bn_p(out_c),
        })
        in_c = out_c
    last_c = make_divisible(1024 * width_mult, divisor) if width_mult > 1.0 else 1024
    raw["fc"] = {
        "w": jax.random.normal(next(keys), (num_classes, last_c), jnp.float32) * 0.01,
        "b": jnp.zeros((num_classes,), jnp.float32),
    }
    return raw


def prepare_params(raw, num_classes):
    """Fold BN, pre-transpose weights into kernel layout, cast to bf16 once."""
    p = {}
    sw = raw["stem"]["w"]                                    # (C0, 3, 3, 3) OIHW
    s_scale, s_bias = _fold_bn(raw["stem"]["bn"])
    p["stem"] = {
        "w": jnp.transpose(sw, (2, 3, 1, 0)).reshape(-1, sw.shape[0]).astype(ACT_DTYPE),
        "scale": s_scale, "bias": s_bias,
    }
    p["blocks"] = []
    for blk in raw["blocks"]:
        dw_scale, dw_bias = _fold_bn(blk["dw_bn"])
        pw_scale, pw_bias = _fold_bn(blk["pw_bn"])
        p["blocks"].append({
            "stride": blk["stride"],
            "dw_w": jnp.transpose(blk["dw_w"][:, 0], (1, 2, 0)).astype(ACT_DTYPE),
            "dw_scale": dw_scale, "dw_bias": dw_bias,
            "pw_w": jnp.transpose(blk["pw_w"][:, :, 0, 0], (1, 0)).astype(ACT_DTYPE),
            "pw_scale": pw_scale, "pw_bias": pw_bias,
        })
    fc_w, fc_b = raw["fc"]["w"], raw["fc"]["b"]              # (ncls, C), (ncls,)
    n_pad = ((num_classes + 127) // 128) * 128               # lane-dense output
    C = fc_w.shape[1]
    w_pad = jnp.zeros((C, n_pad), jnp.float32).at[:, :num_classes].set(fc_w.T)
    b_pad = jnp.zeros((n_pad,), jnp.float32).at[:num_classes].set(fc_b)
    p["fc"] = {"w": w_pad.astype(ACT_DTYPE), "bias": b_pad,
               "scale": jnp.ones((n_pad,), jnp.float32),
               "num_classes": num_classes}
    return p


# ----------------------------------------------------------------------------
# Full forward (input in NCHW like PyTorch)
# ----------------------------------------------------------------------------
def mobilenetv1_forward(params, x_nchw):
    x = jnp.transpose(x_nchw, (0, 2, 3, 1)).astype(ACT_DTYPE)     # -> NHWC bf16
    st = params["stem"]
    x = conv3x3_bn_relu_stem(x, st["w"], st["scale"], st["bias"], stride=2)
    for blk in params["blocks"]:
        if blk["stride"] == 1:
            x = dwconv3x3_bn_relu_s1(x, blk["dw_w"], blk["dw_scale"], blk["dw_bias"])
        else:
            x = dwconv3x3_bn_relu_s2(x, blk["dw_w"], blk["dw_scale"], blk["dw_bias"])
        x = pwconv_bn_relu(x, blk["pw_w"], blk["pw_scale"], blk["pw_bias"])
    N, H, W, C = x.shape
    pooled = global_avgpool(x.reshape(N, H * W, C))               # [N, C]
    fc = params["fc"]
    logits = matmul_bn_act(pooled, fc["w"], fc["scale"], fc["bias"],
                           relu=False, out_dtype=jnp.float32)
    return logits[:, :fc["num_classes"]]


# ----------------------------------------------------------------------------
if __name__ == "__main__":
    key = jax.random.PRNGKey(0)
    k_params, k_x, k1, k2, k3, k4 = jax.random.split(key, 6)

    # --- kernel-level sanity checks against plain-JAX references -------------
    xm = jax.random.normal(k1, (96, 160), jnp.float32).astype(ACT_DTYPE)
    wm = jax.random.normal(k2, (160, 128), jnp.float32).astype(ACT_DTYPE)
    sc = jnp.linspace(0.5, 1.5, 128, dtype=jnp.float32)
    bi = jnp.linspace(-0.1, 0.1, 128, dtype=jnp.float32)
    got = matmul_bn_act(xm, wm, sc, bi, relu=True, out_dtype=jnp.float32)
    ref = jnp.maximum(xm.astype(jnp.float32) @ wm.astype(jnp.float32) * sc + bi, 0.0)
    assert bool(jnp.allclose(got, ref, atol=5e-2, rtol=5e-2))

    def _dw_ref(xf, wf, scale, bias, stride):
        N_, H_, W_, C_ = xf.shape
        Ho_ = (H_ - 1) // stride + 1
        Wo_ = (W_ - 1) // stride + 1
        xp_ = jnp.pad(xf, ((0, 0), (1, 1), (1, 1), (0, 0)))
        acc = jnp.zeros((N_, Ho_, Wo_, C_), jnp.float32)
        for ky in range(3):
            for kx in range(3):
                tap = xp_[:, ky:ky + stride * (Ho_ - 1) + 1:stride,
                          kx:kx + stride * (Wo_ - 1) + 1:stride, :]
                acc = acc + tap * wf[ky, kx]
        return jnp.maximum(acc * scale + bias, 0.0)

    xc = jax.random.normal(k3, (2, 9, 7, 32), jnp.float32).astype(ACT_DTYPE)
    wc = jax.random.normal(k4, (3, 3, 32), jnp.float32).astype(ACT_DTYPE)
    scc = jnp.linspace(0.8, 1.2, 32, dtype=jnp.float32)
    bic = jnp.linspace(-0.05, 0.05, 32, dtype=jnp.float32)
    for stride, fn in ((1, dwconv3x3_bn_relu_s1), (2, dwconv3x3_bn_relu_s2)):
        got_dw = fn(xc, wc, scc, bic).astype(jnp.float32)
        ref_dw = _dw_ref(xc.astype(jnp.float32), wc.astype(jnp.float32),
                         scc, bic, stride)
        assert bool(jnp.allclose(got_dw, ref_dw, atol=5e-2, rtol=5e-2)), stride

    # --- build the network and run the forward pass --------------------------
    num_classes = 16
    raw_params = build_params(k_params, num_classes=num_classes, width_mult=1.0)
    params = prepare_params(raw_params, num_classes)

    # small input consistent with the module: NCHW, 3 input channels
    x = jax.random.normal(k_x, (2, 3, 32, 32), jnp.float32)

    logits = mobilenetv1_forward(params, x)
    logits = jax.block_until_ready(logits)

    assert logits.shape == (2, num_classes), logits.shape
    assert bool(jnp.all(jnp.isfinite(logits)))
    print("KERNEL_OK")
</pallas_src>

<mosaic_0001>
module attributes {stable_mosaic.version = 11 : i64} {
  func.func @_matmul_bn_act_kernel(%arg0: i32, %arg1: memref<96x160xbf16, #tpu.memory_space<vmem>>, %arg2: memref<160x128xbf16, #tpu.memory_space<vmem>>, %arg3: memref<1x128xf32, #tpu.memory_space<vmem>>, %arg4: memref<1x128xf32, #tpu.memory_space<vmem>>, %arg5: memref<96x128xf32, #tpu.memory_space<vmem>>) attributes {dimension_semantics = [#tpu.dimension_semantics<parallel>], iteration_bounds = array<i64: 1>, scalar_prefetch = 0 : i64, scratch_operands = 0 : i64, tpu.core_type = #tpu.core_type<tc>, window_params = [{transform_indices = @transform_0, window_bounds = array<i64: 96, 160>}, {pipeline_mode = #tpu.pipeline_mode<synchronous>, transform_indices = @transform_1, window_bounds = array<i64: 160, 128>}, {pipeline_mode = #tpu.pipeline_mode<synchronous>, transform_indices = @transform_2, window_bounds = array<i64: 1, 128>}, {pipeline_mode = #tpu.pipeline_mode<synchronous>, transform_indices = @transform_3, window_bounds = array<i64: 1, 128>}, {transform_indices = @transform_4, window_bounds = array<i64: 96, 128>}]} {
    %c0 = arith.constant 0 : index
    %c0_0 = arith.constant 0 : index
    %0 = vector.load %arg1[%c0, %c0_0] : memref<96x160xbf16, #tpu.memory_space<vmem>>, vector<96x160xbf16>
    %c0_1 = arith.constant 0 : index
    %c0_2 = arith.constant 0 : index
    %1 = vector.load %arg2[%c0_1, %c0_2] : memref<160x128xbf16, #tpu.memory_space<vmem>>, vector<160x128xbf16>
    %cst = arith.constant dense<0.000000e+00> : vector<96x128xf32>
    %2 = tpu.matmul %0, %1, %cst {dimension_numbers = #tpu.dot_dimension_numbers<[1], [0], [0], [1], [0, 0, 1, 1], [], []>} : vector<96x160xbf16>, vector<160x128xbf16>, vector<96x128xf32> -> vector<96x128xf32>
    %c0_3 = arith.constant 0 : index
    %c0_4 = arith.constant 0 : index
    %3 = vector.load %arg3[%c0_3, %c0_4] : memref<1x128xf32, #tpu.memory_space<vmem>>, vector<1x128xf32>
    %4 = vector.broadcast %3 : vector<1x128xf32> to vector<96x128xf32>
    %5 = arith.mulf %2, %4 : vector<96x128xf32>
    %c0_5 = arith.constant 0 : index
    %c0_6 = arith.constant 0 : index
    %6 = vector.load %arg4[%c0_5, %c0_6] : memref<1x128xf32, #tpu.memory_space<vmem>>, vector<1x128xf32>
    %7 = vector.broadcast %6 : vector<1x128xf32> to vector<96x128xf32>
    %8 = arith.addf %5, %7 : vector<96x128xf32>
    %cst_7 = arith.constant 0.000000e+00 : f32
    %9 = vector.broadcast %cst_7 : f32 to vector<96x128xf32>
    %10 = arith.maximumf %8, %9 : vector<96x128xf32>
    %c0_8 = arith.constant 0 : index
    %c0_9 = arith.constant 0 : index
    %11 = vector.load %arg5[%c0_8, %c0_9] : memref<96x128xf32, #tpu.memory_space<vmem>>, vector<96x128xf32>
    tpu.vector_store %arg5[%c0_8, %c0_9], %10 {strides = array<i32>} : memref<96x128xf32, #tpu.memory_space<vmem>>, vector<96x128xf32>,
    return
  }
  func.func @transform_0(%arg0: i32) -> (i32, i32) {
    %c0_i32 = arith.constant 0 : i32
    %c0_i32_0 = arith.constant 0 : i32
    return %arg0, %c0_i32 : i32, i32
  }
  func.func @transform_1(%arg0: i32) -> (i32, i32) {
    %c0_i32 = arith.constant 0 : i32
    %c0_i32_0 = arith.constant 0 : i32
    %c0_i32_1 = arith.constant 0 : i32
    return %c0_i32, %c0_i32_0 : i32, i32
  }
  func.func @transform_2(%arg0: i32) -> (i32, i32) {
    %c0_i32 = arith.constant 0 : i32
    %c0_i32_0 = arith.constant 0 : i32
    %c0_i32_1 = arith.constant 0 : i32
    return %c0_i32, %c0_i32_0 : i32, i32
  }
  func.func @transform_3(%arg0: i32) -> (i32, i32) {
    %c0_i32 = arith.constant 0 : i32
    %c0_i32_0 = arith.constant 0 : i32
    %c0_i32_1 = arith.constant 0 : i32
    return %c0_i32, %c0_i32_0 : i32, i32
  }
  func.func @transform_4(%arg0: i32) -> (i32, i32) {
    %c0_i32 = arith.constant 0 : i32
    %c0_i32_0 = arith.constant 0 : i32
    return %arg0, %c0_i32 : i32, i32
  }
}

</mosaic_0001>

<llo_original>
// kernel: tpu_custom_call.1
$region0: #{tpu_custom_call.1}
  #allocation0 [shape = 'u32[]', space=smem, size = 0x4, offset = 0x4, fixed_abs, tag = 'smem constant byte address 0x4 - core index']
  #allocation1 [shape = 'u32[72,128]{1,0:T(1,128)}', space=vmem, size = 0x9000, scoped, tag = 'internal scratch']
  %s0 = inlined_call_operand.vmem [shape: bf16[96,160], index: 0, kind: input, shape index: {}]
  %s1 = inlined_call_operand.vmem [shape: bf16[160,128], index: 1, kind: input, shape index: {}]
  %s2 = inlined_call_operand.vmem [shape: f32[1,128], index: 2, kind: input, shape index: {}]
  %s3 = inlined_call_operand.vmem [shape: f32[1,128], index: 3, kind: input, shape index: {}]
  %s4 = inlined_call_operand.hbm [shape: f32[96,128], index: 4, kind: output, shape index: {}]
  %s5 = sld [smem:[#allocation0]]
  $region26: #{tpu_custom_call.1} parent=0
    _
  %s7 = ssub.s32 1, %s5
  %s8 = scalar_select 0, %s7, %s5
  $region1: #{tpu_custom_call.1} parent=0
    #allocation2 [shape = 'u8[49152]{0}', space=vmem, size = 0xc000, scoped, tag = 'output window, operand 0, single buffered']
    #allocation3 [shape = 's32[1]{0}', space=sflag, size = 0x4, scoped, tag = 'scoped memory for tpu_custom_call.1']
    %9 = vsyncpa [#allocation3], 0
    // Predicated region
    $region2: #{tpu_custom_call.1} parent=1 // pred_check
      _
    $region3: #{tpu_custom_call.1} parent=1 // pred_check_branch
      %11 = sbr.rel (0) target = $region5
    $region4: #{tpu_custom_call.1} parent=1 // pred_region
      _
    $region5: #{tpu_custom_call.1} parent=1 // pred_fallthru
      _
    // Predicated region
    $region6: #{tpu_custom_call.1} parent=1 // pred_check
      _
    $region7: #{tpu_custom_call.1} parent=1 // pred_check_branch
      %13 = sbr.rel (0) target = $region9
    $region8: #{tpu_custom_call.1} parent=1 // pred_region
      _
    $region9: #{tpu_custom_call.1} parent=1 // pred_fallthru
      _
    // Predicated region
    $region10: #{tpu_custom_call.1} parent=1 // pred_check
      _
    $region11: #{tpu_custom_call.1} parent=1 // pred_check_branch
      %15 = sbr.rel (0) target = $region13
    $region12: #{tpu_custom_call.1} parent=1 // pred_region
      _
    $region13: #{tpu_custom_call.1} parent=1 // pred_fallthru
      _
    // Predicated region
    $region14: #{tpu_custom_call.1} parent=1 // pred_check
      _
    $region15: #{tpu_custom_call.1} parent=1 // pred_check_branch
      %17 = sbr.rel (0) target = $region17
    $region16: #{tpu_custom_call.1} parent=1 // pred_region
      _
    $region17: #{tpu_custom_call.1} parent=1 // pred_fallthru
      _
    %v19 = vld [vmem:[%s0] sm:$0xff]
    %v20 = vld [vmem:[%s0 + $0x8] sm:$0xff]
    %v21 = vld [vmem:[%s0 + $0x10] sm:$0xff]
    %v22 = vld [vmem:[%s0 + $0x18] sm:$0xff]
    %v23 = vld [vmem:[%s0 + $0x20] sm:$0xff]
    %v24 = vld [vmem:[%s0 + $0x28] sm:$0xff]
    %v25 = vld [vmem:[%s0 + $0x30] sm:$0xff]
    %v26 = vld [vmem:[%s0 + $0x38] sm:$0xff]
    %v27 = vld [vmem:[%s0 + $0x40] sm:$0xff]
    %v28 = vld [vmem:[%s0 + $0x48] sm:$0xff]
    %v29 = vld [vmem:[%s0 + $0x50] sm:$0xff]
    %v30 = vld [vmem:[%s0 + $0x58] sm:$0xff]
    %v31 = vld [vmem:[%s1] sm:$0xf]
    %v32 = vld [vmem:[%s1 + $0x4] sm:$0xf]
    %v33 = vld [vmem:[%s1 + $0x8] sm:$0xf]
    %v34 = vld [vmem:[%s1 + $0xc] sm:$0xf]
    %v35 = vld [vmem:[%s1 + $0x10] sm:$0xf]
    %v36 = vld [vmem:[%s1 + $0x14] sm:$0xf]
    %v37 = vld [vmem:[%s1 + $0x18] sm:$0xf]
    %v38 = vld [vmem:[%s1 + $0x1c] sm:$0xf]
    %v39 = vld [vmem:[%s1 + $0x20] sm:$0xf]
    %v40 = vld [vmem:[%s1 + $0x24] sm:$0xf]
    %v41 = vld [vmem:[%s1 + $0x28] sm:$0xf]
    %v42 = vld [vmem:[%s1 + $0x2c] sm:$0xf]
    %v43 = vld [vmem:[%s1 + $0x30] sm:$0xf]
    %v44 = vld [vmem:[%s1 + $0x34] sm:$0xf]
    %v45 = vld [vmem:[%s1 + $0x38] sm:$0xf]
    %v46 = vld [vmem:[%s1 + $0x3c] sm:$0xf]
    %v47 = vld [vmem:[%s1 + $0x40] sm:$0xf]
    %v48 = vld [vmem:[%s1 + $0x44] sm:$0xf]
    %v49 = vld [vmem:[%s1 + $0x48] sm:$0xf]
    %v50 = vld [vmem:[%s1 + $0x4c] sm:$0xf]
    %v63 = vunpack.c.l.b16 %v19
    %v64 = vunpack.c.h.b16 %v19
    %v65 = vunpack.c.l.b16 %v20
    %v66 = vunpack.c.h.b16 %v20
    %v67 = vunpack.c.l.b16 %v21
    %v68 = vunpack.c.h.b16 %v21
    %v69 = vunpack.c.l.b16 %v22
    %v70 = vunpack.c.h.b16 %v22
    %v71 = vunpack.c.l.b16 %v23
    %v72 = vunpack.c.h.b16 %v23
    %v73 = vunpack.c.l.b16 %v24
    %v74 = vunpack.c.h.b16 %v24
    %v75 = vunpack.c.l.b16 %v25
    %v76 = vunpack.c.h.b16 %v25
    %v77 = vunpack.c.l.b16 %v26
    %v78 = vunpack.c.h.b16 %v26
    %v79 = vunpack.c.l.b16 %v27
    %v80 = vunpack.c.h.b16 %v27
    %v81 = vunpack.c.l.b16 %v28
    %v82 = vunpack.c.h.b16 %v28
    %v83 = vunpack.c.l.b16 %v29
    %v84 = vunpack.c.h.b16 %v29
    %v85 = vunpack.c.l.b16 %v30
    %v86 = vunpack.c.h.b16 %v30
    %v87 = vpack.c.b16 %v65, %v63
    %v88 = vpack.c.b16 %v66, %v64
    %v89 = vpack.c.b16 %v69, %v67
    %v90 = vpack.c.b16 %v70, %v68
    %v91 = vpack.c.b16 %v73, %v71
    %v92 = vpack.c.b16 %v74, %v72
    %v93 = vpack.c.b16 %v77, %v75
    %v94 = vpack.c.b16 %v78, %v76
    %v95 = vpack.c.b16 %v81, %v79
    %v96 = vpack.c.b16 %v82, %v80
    %v97 = vpack.c.b16 %v85, %v83
    %v98 = vpack.c.b16 %v86, %v84
    %v125 = vunpack.c.l.b16 %v31
    %v126 = vunpack.c.l.b16 %v32
    %v127 = vunpack.c.l.b16 %v33
    %v128 = vunpack.c.l.b16 %v34
    %v129 = vunpack.c.l.b16 %v35
    %v130 = vunpack.c.l.b16 %v36
    %v131 = vunpack.c.l.b16 %v37
    %v132 = vunpack.c.l.b16 %v38
    %v133 = vunpack.c.l.b16 %v39
    %v134 = vunpack.c.l.b16 %v40
    %v135 = vunpack.c.l.b16 %v41
    %v136 = vunpack.c.l.b16 %v42
    %v137 = vunpack.c.l.b16 %v43
    %v138 = vunpack.c.l.b16 %v44
    %v139 = vunpack.c.l.b16 %v45
    %v140 = vunpack.c.l.b16 %v46
    %v141 = vunpack.c.l.b16 %v47
    %v142 = vunpack.c.l.b16 %v48
    %v143 = vunpack.c.l.b16 %v49
    %v144 = vunpack.c.l.b16 %v50
    %v145 = vpack.c.b16 %v126, %v125
    %v146 = vpack.c.b16 %v128, %v127
    %v147 = vpack.c.b16 %v130, %v129
    %v148 = vpack.c.b16 %v132, %v131
    %v149 = vpack.c.b16 %v134, %v133
    %v150 = vpack.c.b16 %v136, %v135
    %v151 = vpack.c.b16 %v138, %v137
    %v152 = vpack.c.b16 %v140, %v139
    %v153 = vpack.c.b16 %v142, %v141
    %v154 = vpack.c.b16 %v144, %v143
    %vm165 = vcmask 261120
    %v167 = vsel %vm165, %v88, 0
    %v170 = vsel %vm165, %v90, 0
    %v173 = vsel %vm165, %v92, 0
    %v176 = vsel %vm165, %v94, 0
    %v179 = vsel %vm165, %v96, 0
    %v182 = vsel %vm165, %v98, 0
    %184 = vmatpush.bf16.msra.mxu0 %v152
    %185 = vmatpush.bf16.msra.mxu0 %v151
    %186 = vmatpush.bf16.msra.mxu0 %v150
    %187 = vmatpush.bf16.msra.mxu0 %v149
    %188 = vmatpush.bf16.msra.mxu0 %v148
    %189 = vmatpush.bf16.msra.mxu0 %v147
    %190 = vmatpush.bf16.msra.mxu0 %v146
    %191 = vmatpush.bf16.msra.mxu0 %v145
    %192 = vmatmul.bf16.gmra.mxu0 %v87
    %v193 = vpop.f32.mrf.mxu0
    %v194 = vadd.f32 0.0, %v193
    %v195 = vpop.f32.mrf.mxu0
    %v196 = vadd.f32 0.0, %v195
    %197 = vmatmul.bf16.gmra.mxu0 %v89
    %v198 = vpop.f32.mrf.mxu0
    %v199 = vadd.f32 0.0, %v198
    %v200 = vpop.f32.mrf.mxu0
    %v201 = vadd.f32 0.0, %v200
    %202 = vmatmul.bf16.gmra.mxu0 %v91
    %v203 = vpop.f32.mrf.mxu0
    %v204 = vadd.f32 0.0, %v203
    %v205 = vpop.f32.mrf.mxu0
    %v206 = vadd.f32 0.0, %v205
    %207 = vmatmul.bf16.gmra.mxu0 %v93
    %v208 = vpop.f32.mrf.mxu0
    %v209 = vadd.f32 0.0, %v208
    %v210 = vpop.f32.mrf.mxu0
    %v211 = vadd.f32 0.0, %v210
    %212 = vmatmul.bf16.gmra.mxu0 %v95
    %v213 = vpop.f32.mrf.mxu0
    %v214 = vadd.f32 0.0, %v213
    %v215 = vpop.f32.mrf.mxu0
    %v216 = vadd.f32 0.0, %v215
    %217 = vmatmul.bf16.gmra.mxu0 %v97
    %v218 = vpop.f32.mrf.mxu0
    %v219 = vadd.f32 0.0, %v218
    %v220 = vpop.f32.mrf.mxu0
    %v221 = vadd.f32 0.0, %v220
    %222 = vdwg.mxu0
    %223 = vmatpush.bf16.msra.mxu0 0
    %224 = vmatpush.bf16.msra.mxu0 0
    %225 = vmatpush.bf16.msra.mxu0 0
    %226 = vmatpush.bf16.msra.mxu0 0
    %227 = vmatpush.bf16.msra.mxu0 0
    %228 = vmatpush.bf16.msra.mxu0 0
    %229 = vmatpush.bf16.msra.mxu0 %v154
    %230 = vmatpush.bf16.msra.mxu0 %v153
    %231 = vmatmul.bf16.gmra.mxu0 %v167
    %v232 = vpop.f32.mrf.mxu0
    %v233 = vadd.f32 %v194, %v232
    %v234 = vpop.f32.mrf.mxu0
    %v235 = vadd.f32 %v196, %v234
    %236 = vmatmul.bf16.gmra.mxu0 %v170
    %v237 = vpop.f32.mrf.mxu0
    %v238 = vadd.f32 %v199, %v237
    %v239 = vpop.f32.mrf.mxu0
    %v240 = vadd.f32 %v201, %v239
    %241 = vmatmul.bf16.gmra.mxu0 %v173
    %v242 = vpop.f32.mrf.mxu0
    %v243 = vadd.f32 %v204, %v242
    %v244 = vpop.f32.mrf.mxu0
    %v245 = vadd.f32 %v206, %v244
    %246 = vmatmul.bf16.gmra.mxu0 %v176
    %v247 = vpop.f32.mrf.mxu0
    %v248 = vadd.f32 %v209, %v247
    %v249 = vpop.f32.mrf.mxu0
    %v250 = vadd.f32 %v211, %v249
    %251 = vmatmul.bf16.gmra.mxu0 %v179
    %v252 = vpop.f32.mrf.mxu0
    %v253 = vadd.f32 %v214, %v252
    %v254 = vpop.f32.mrf.mxu0
    %v255 = vadd.f32 %v216, %v254
    %256 = vmatmul.bf16.gmra.mxu0 %v182
    %v257 = vpop.f32.mrf.mxu0
    %v258 = vadd.f32 %v219, %v257
    %v259 = vpop.f32.mrf.mxu0
    %v260 = vadd.f32 %v221, %v259
    %261 = vdwg.mxu0
    %v262 = vld [vmem:[%s2] sm:$0x1]
    %v264 = vperm.slane %v262, 0
    %v266 = vmul.f32 %v233, %v264
    %v267 = vmul.f32 %v235, %v264
    %v268 = vmul.f32 %v238, %v264
    %v269 = vmul.f32 %v240, %v264
    %v270 = vmul.f32 %v243, %v264
    %v271 = vmul.f32 %v245, %v264
    %v272 = vmul.f32 %v248, %v264
    %v273 = vmul.f32 %v250, %v264
    %v274 = vmul.f32 %v253, %v264
    %v275 = vmul.f32 %v255, %v264
    %v276 = vmul.f32 %v258, %v264
    %v277 = vmul.f32 %v260, %v264
    %v278 = vld [vmem:[%s3] sm:$0x1]
    %v280 = vperm.slane %v278, 0
    %v282 = vadd.f32 %v266, %v280
    %v283 = vadd.f32 %v267, %v280
    %v284 = vadd.f32 %v268, %v280
    %v285 = vadd.f32 %v269, %v280
    %v286 = vadd.f32 %v270, %v280
    %v287 = vadd.f32 %v271, %v280
    %v288 = vadd.f32 %v272, %v280
    %v289 = vadd.f32 %v273, %v280
    %v290 = vadd.f32 %v274, %v280
    %v291 = vadd.f32 %v275, %v280
    %v292 = vadd.f32 %v276, %v280
    %v293 = vadd.f32 %v277, %v280
    %v294 = vmax.f32 %v282, 0.0
    %v295 = vmax.f32 %v283, 0.0
    %v296 = vmax.f32 %v284, 0.0
    %v297 = vmax.f32 %v285, 0.0
    %v298 = vmax.f32 %v286, 0.0
    %v299 = vmax.f32 %v287, 0.0
    %v300 = vmax.f32 %v288, 0.0
    %v301 = vmax.f32 %v289, 0.0
    %v302 = vmax.f32 %v290, 0.0
    %v303 = vmax.f32 %v291, 0.0
    %v304 = vmax.f32 %v292, 0.0
    %v305 = vmax.f32 %v293, 0.0
    %306 = vst [vmem:[#allocation2] sm:$0xff] %v294
    %307 = vst [vmem:[#allocation2 + $0x8] sm:$0xff] %v295
    %308 = vst [vmem:[#allocation2 + $0x10] sm:$0xff] %v296
    %309 = vst [vmem:[#allocation2 + $0x18] sm:$0xff] %v297
    %310 = vst [vmem:[#allocation2 + $0x20] sm:$0xff] %v298
    %311 = vst [vmem:[#allocation2 + $0x28] sm:$0xff] %v299
    %312 = vst [vmem:[#allocation2 + $0x30] sm:$0xff] %v300
    %313 = vst [vmem:[#allocation2 + $0x38] sm:$0xff] %v301
    %314 = vst [vmem:[#allocation2 + $0x40] sm:$0xff] %v302
    %315 = vst [vmem:[#allocation2 + $0x48] sm:$0xff] %v303
    %316 = vst [vmem:[#allocation2 + $0x50] sm:$0xff] %v304
    %317 = vst [vmem:[#allocation2 + $0x58] sm:$0xff] %v305
    // Predicated region
    $region18: #{tpu_custom_call.1} parent=1 // pred_check
      _
    $region19: #{tpu_custom_call.1} parent=1 // pred_check_branch
      %319 = sbr.rel (0) target = $region21
    $region20: #{tpu_custom_call.1} parent=1 // pred_region
      %321 = vsyncadd [#allocation3], 0
      %s322 = sshll.u32 [#allocation2], 4
      %s323 = int_to_ptr.vmem [resolvable:$true] %s322
      %s324 = sshll.u32 %s4, 4
      %s325 = int_to_ptr.hbm [resolvable:$true] %s324
      %330 = dma.vmem_to_hbm [thread:$0]  %s323, 1536, %s325, [#allocation3], 128, 128, 8
    $region21: #{tpu_custom_call.1} parent=1 // pred_fallthru
      _
    // Predicated region
    $region22: #{tpu_custom_call.1} parent=1 // pred_check
      _
    $region23: #{tpu_custom_call.1} parent=1 // pred_check_branch
      %332 = sbr.rel (0) target = $region25
    $region24: #{tpu_custom_call.1} parent=1 // pred_region
      %334 = dma.done [#allocation3], 1536
    $region25: #{tpu_custom_call.1} parent=1 // pred_fallthru
      _
    %335 = vsyncpa [#allocation3], 1

</llo_original>
